<compile_context>
chip_gen: v7x
topology: tpu7x:2x2x1
jax: 0.10.0
libtpu: 0.0.40
codegen_flags: <defaults>
</compile_context>

<pallas_src>
import functools

import jax
import jax.numpy as jnp
from jax.experimental import pallas as pl
from jax.experimental.pallas import tpu as pltpu


def _spatial_gate_kernel(coef_ref, cw_ref, x_ref, o_ref, *, H, W, approx):
    # coef_ref : SMEM (2,)  = (0.5 + sigmoid(w0), 0.5 + sigmoid(w1))
    # cw_ref   : SMEM (9,)  = 3x3 conv weight, row-major
    # x_ref    : VMEM (Nb, C, HWp)  batch block, lane-dense (HWp = H*W padded to 128)
    # o_ref    : VMEM (Nb, HWp)
    Nb, C, HWp = x_ref.shape
    f32 = jnp.float32

    # ---- shifted one-pass channel mean / unbiased std (torch.std, ddof=1) ----
    # Shift by channel 0 (close to the mean) so the sum-of-squares formulation
    # does not cancel catastrophically for non-zero-mean, low-variance inputs.
    # Per-channel slices avoid a full x / x*x block temporary and the
    # cross-sublane reduce of jnp.sum(..., axis=1).
    x0 = x_ref[:, 0, :].astype(f32)                      # (Nb, HWp)
    s = jnp.zeros_like(x0)
    q = jnp.zeros_like(x0)
    # TODO(synk): for very large C switch to a rolled fori_loop (or an MXU
    # ones(1,C) @ X reduction) instead of full static unrolling.
    for c in range(1, C):
        d = x_ref[:, c, :].astype(f32) - x0
        s = s + d
        q = q + d * d
    inv_c = 1.0 / C
    inv_cm1 = (1.0 / (C - 1)) if C > 1 else float("nan")  # C==1 -> NaN std (torch)
    mean = x0 + s * inv_c
    var = (q - s * s * inv_c) * inv_cm1
    std = jnp.sqrt(jnp.maximum(var, 0.0))

    out = coef_ref[0] * mean + coef_ref[1] * std          # (Nb, HWp), lane dense

    # ---- hoisted boundary masks for the roll-based stencils ------------------
    idx = jax.lax.broadcasted_iota(jnp.int32, (Nb, HWp), 1)   # flat index i*W + j
    col = idx % W              # cheap (bitwise AND) when W is a power of two
    ok_left = col >= 1                 # source (i, j-1) exists
    ok_right = col <= W - 2            # source (i, j+1) exists
    ok_up = idx >= W                   # source (i-1, j) exists
    ok_down = idx < (H - 1) * W        # source (i+1, j) exists
    zero = jnp.zeros_like(out)         # hoisted (broadcasts are not CSE'd)

    def shift_h(v, dj):
        """Value at (i, j+dj); zero outside the HxW image (XLU roll + mask)."""
        r = pltpu.roll(v, (-dj) % HWp, 1)
        return jnp.where(ok_right if dj > 0 else ok_left, r, zero)

    def shift_v(v, di):
        """Value at (i+di, j); zero outside the HxW image (XLU roll + mask)."""
        r = pltpu.roll(v, (-di * W) % HWp, 1)
        return jnp.where(ok_down if di > 0 else ok_up, r, zero)

    # ---- Conv2d(1, 1, 3, stride=1, padding=1, bias=False), zero padding ------
    # Factored row-then-column: one horizontal 3-tap per weight row, then a
    # vertical gather.  2 horizontal + 2 vertical rolls instead of 8.
    hL = shift_h(out, -1)
    hR = shift_h(out, +1)
    g_m = cw_ref[0] * hL + cw_ref[1] * out + cw_ref[2] * hR   # weight row di=-1
    g_0 = cw_ref[3] * hL + cw_ref[4] * out + cw_ref[5] * hR   # weight row di= 0
    g_p = cw_ref[6] * hL + cw_ref[7] * out + cw_ref[8] * hR   # weight row di=+1
    conv = shift_v(g_m, -1) + g_0 + shift_v(g_p, +1)

    # ---- AvgPool2d(3, 1, 1), count_include_pad=True -> /9, separable ---------
    vsum = shift_v(conv, -1) + conv + shift_v(conv, +1)       # 3-tap vertical
    pooled = (shift_h(vsum, -1) + vsum + shift_h(vsum, +1)) * (1.0 / 9.0)

    # ---- sigmoid on the EUP: exp + (approximate) reciprocal ------------------
    o_ref[...] = pl.reciprocal(1.0 + jnp.exp(-pooled), approx=approx)


def _tpu_generation():
    """Best-effort TPU generation (5 / 6 / 7); defaults to 6 if unknown."""
    try:
        kind = jax.devices()[0].device_kind.lower()
    except Exception:
        return 6
    for g in (7, 6, 5, 4):
        if (f"v{g}" in kind) or (f"tpu{g}" in kind):
            return g
    return 6


def _generation_config():
    gen = _tpu_generation()
    if gen >= 7:
        # v7x: 64 MiB physical / 32 MiB scoped VMEM, 2 TensorCores.  Budget the
        # whole grid step (dbl-buffered input + live temporaries + output),
        # keep >=2 grid steps so the batch axis can split across the 2 cores,
        # and ask for core-parallel semantics (fall back if not supported).
        return dict(vmem_budget=24 << 20, vmem_limit=32 << 20, min_grid_steps=2,
                    dim_semantics=pltpu.CORE_PARALLEL, fallback_semantics="arbitrary")
    # v5e / v6e: single TensorCore, 128 MiB VMEM -> one big block per step, no
    # point forcing extra grid steps (only ~0.35us/step overhead + smaller DMAs).
    return dict(vmem_budget=48 << 20, vmem_limit=64 << 20, min_grid_steps=1,
                dim_semantics="arbitrary", fallback_semantics=None)


def _pick_block_batch(N, C, lanes, *, x_itemsize, vmem_budget, min_grid_steps):
    """Batch-block size: as large as the per-step VMEM budget allows, rounded to
    a multiple of 8 (full sublane occupancy downstream) when N allows."""
    # Per-batch-element VMEM cost of one grid step: 2x double-buffered x block
    # + ~12 live f32 (Nb, lanes) temporaries + 2x double-buffered output row.
    per_batch = lanes * (2 * C * x_itemsize + 14 * 4)
    cap = max(1, min(N, vmem_budget // per_batch))
    if min_grid_steps > 1 and N >= min_grid_steps:
        cap = min(cap, pl.cdiv(N, min_grid_steps))   # keep >=2 steps (v7x only)
    if cap >= N:
        return N                                     # whole batch, no padding
    if cap >= 8:
        return (cap // 8) * 8                        # full 8-sublane groups
    # TODO(synk): for very large C*H*W (cap < 8 here) add spatial (HW) tiling
    # instead of tiny batch blocks.
    return cap


def spatial_gate(x, weight, conv_weight, *, block_batch=None, approx_sigmoid=True):
    """x: (N, C, H, W) float (f32 or bf16); weight: (2,); conv_weight: (1,1,3,3).

    Returns the (N, 1, H, W) spatial gate (sigmoid scale), matching the PyTorch
    SpatialGate forward.  bf16 x halves HBM read bytes; accumulation stays f32.
    """
    N, C, H, W = x.shape
    HW = H * W
    HWp = ((HW + 127) // 128) * 128            # lane-dense padding of H*W
    cfg = _generation_config()

    coefs = (0.5 + jax.nn.sigmoid(weight)).astype(jnp.float32)   # (2,) scalars
    convw = conv_weight.reshape(9).astype(jnp.float32)           # flat 1-D SMEM
    x_flat = x.reshape(N, C, HW)
    if HWp != HW:
        x_flat = jnp.pad(x_flat, ((0, 0), (0, 0), (0, HWp - HW)))

    if block_batch is None:
        block_batch = _pick_block_batch(
            N, C, HWp, x_itemsize=x_flat.dtype.itemsize,
            vmem_budget=cfg["vmem_budget"], min_grid_steps=cfg["min_grid_steps"])
    # Ragged tail: pad the batch up to a multiple of block_batch (sliced off below).
    n_steps = pl.cdiv(N, block_batch)
    Np = n_steps * block_batch
    if Np != N:
        x_flat = jnp.pad(x_flat, ((0, Np - N), (0, 0), (0, 0)))

    kernel = functools.partial(_spatial_gate_kernel, H=H, W=W, approx=approx_sigmoid)

    def run(dim_sem):
        return pl.pallas_call(
            kernel,
            out_shape=jax.ShapeDtypeStruct((Np, HWp), jnp.float32),
            grid=(n_steps,),
            in_specs=[
                pl.BlockSpec(memory_space=pltpu.SMEM),                      # coefs
                pl.BlockSpec(memory_space=pltpu.SMEM),                      # conv w
                pl.BlockSpec((block_batch, C, HWp), lambda n: (n, 0, 0)),   # x block
            ],
            out_specs=pl.BlockSpec((block_batch, HWp), lambda n: (n, 0)),
            compiler_params=pltpu.CompilerParams(
                dimension_semantics=(dim_sem,),
                vmem_limit_bytes=cfg["vmem_limit"],
            ),
        )(coefs, convw, x_flat)

    try:
        out = run(cfg["dim_semantics"])
    except Exception:
        # Safety net: if CORE_PARALLEL is not accepted on this chip/runtime,
        # fall back to plain semantics rather than failing.
        if cfg["fallback_semantics"] is None:
            raise
        out = run(cfg["fallback_semantics"])

    return out[:N, :HW].reshape(N, 1, H, W)


def reference(x, weight, conv_weight):
    """Pure-JAX reference mirroring the PyTorch SpatialGate forward."""
    mean = x.mean(axis=1, keepdims=True)
    std = x.std(axis=1, keepdims=True, ddof=1)
    w = jax.nn.sigmoid(weight)
    out = (0.5 + w[0]) * mean + (0.5 + w[1]) * std
    dn = ("NCHW", "OIHW", "NCHW")
    out = jax.lax.conv_general_dilated(out, conv_weight, (1, 1),
                                       ((1, 1), (1, 1)), dimension_numbers=dn)
    pool_k = jnp.ones((1, 1, 3, 3), jnp.float32) / 9.0
    out = jax.lax.conv_general_dilated(out, pool_k, (1, 1),
                                       ((1, 1), (1, 1)), dimension_numbers=dn)
    return jax.nn.sigmoid(out)


if __name__ == "__main__":
    key = jax.random.PRNGKey(0)
    kx, kw, kc = jax.random.split(key, 3)

    N, C, H, W = 2, 4, 16, 16
    x = jax.random.normal(kx, (N, C, H, W), dtype=jnp.float32)

    # deterministic synthetic parameters (shapes from __init__)
    weight = jax.random.uniform(kw, (2,), dtype=jnp.float32)         # torch.rand(2)
    fan_in = 1 * 3 * 3
    bound = 1.0 / (fan_in ** 0.5)
    conv_w = jax.random.uniform(kc, (1, 1, 3, 3), dtype=jnp.float32,
                                minval=-bound, maxval=bound)

    ref = reference(x, weight, conv_w)

    # Exact path (VPU divide sigmoid) — bit-accurate check vs reference.
    out_exact = jax.block_until_ready(
        spatial_gate(x, weight, conv_w, approx_sigmoid=False))
    assert out_exact.shape == (N, 1, H, W)
    assert jnp.allclose(out_exact, ref, atol=1e-5, rtol=1e-5), "exact-path mismatch"

    # Default fast path (EUP approximate reciprocal in the sigmoid).
    out = jax.block_until_ready(spatial_gate(x, weight, conv_w))
    assert out.shape == (N, 1, H, W)
    assert jnp.allclose(out, ref, atol=5e-3, rtol=5e-3), "approx-path mismatch"

    print("KERNEL_OK")
</pallas_src>

<mosaic_0001>
module attributes {stable_mosaic.version = 11 : i64} {
  func.func @_spatial_gate_kernel(%arg0: i32, %arg1: memref<2xf32, #tpu.memory_space<smem>>, %arg2: memref<9xf32, #tpu.memory_space<smem>>, %arg3: memref<2x4x256xf32, #tpu.memory_space<vmem>>, %arg4: memref<2x256xf32, #tpu.memory_space<vmem>>) attributes {dimension_semantics = [#tpu.dimension_semantics<arbitrary>], iteration_bounds = array<i64: 1>, scalar_prefetch = 0 : i64, scratch_operands = 0 : i64, tpu.core_type = #tpu.core_type<tc>, window_params = [{transform_indices = @transform_0, window_bounds = array<i64: 2>}, {transform_indices = @transform_1, window_bounds = array<i64: 9>}, {transform_indices = @transform_2, window_bounds = array<i64: 2, 4, 256>}, {transform_indices = @transform_3, window_bounds = array<i64: 2, 256>}]} {
    %c0 = arith.constant 0 : index
    %c0_0 = arith.constant 0 : index
    %c0_1 = arith.constant 0 : index
    %0 = vector.load %arg3[%c0, %c0_0, %c0_1] : memref<2x4x256xf32, #tpu.memory_space<vmem>>, vector<2x1x256xf32>
    %1 = vector.shape_cast %0 : vector<2x1x256xf32> to vector<2x256xf32>
    %cst = arith.constant 0.000000e+00 : f32
    %2 = vector.broadcast %cst : f32 to vector<2x256xf32>
    %cst_2 = arith.constant 0.000000e+00 : f32
    %3 = vector.broadcast %cst_2 : f32 to vector<2x256xf32>
    %c0_3 = arith.constant 0 : index
    %c1 = arith.constant 1 : index
    %c0_4 = arith.constant 0 : index
    %4 = vector.load %arg3[%c0_3, %c1, %c0_4] : memref<2x4x256xf32, #tpu.memory_space<vmem>>, vector<2x1x256xf32>
    %5 = vector.shape_cast %4 : vector<2x1x256xf32> to vector<2x256xf32>
    %6 = arith.subf %5, %1 : vector<2x256xf32>
    %7 = arith.addf %2, %6 : vector<2x256xf32>
    %8 = arith.mulf %6, %6 : vector<2x256xf32>
    %9 = arith.addf %3, %8 : vector<2x256xf32>
    %c0_5 = arith.constant 0 : index
    %c2 = arith.constant 2 : index
    %c0_6 = arith.constant 0 : index
    %10 = vector.load %arg3[%c0_5, %c2, %c0_6] : memref<2x4x256xf32, #tpu.memory_space<vmem>>, vector<2x1x256xf32>
    %11 = vector.shape_cast %10 : vector<2x1x256xf32> to vector<2x256xf32>
    %12 = arith.subf %11, %1 : vector<2x256xf32>
    %13 = arith.addf %7, %12 : vector<2x256xf32>
    %14 = arith.mulf %12, %12 : vector<2x256xf32>
    %15 = arith.addf %9, %14 : vector<2x256xf32>
    %c0_7 = arith.constant 0 : index
    %c3 = arith.constant 3 : index
    %c0_8 = arith.constant 0 : index
    %16 = vector.load %arg3[%c0_7, %c3, %c0_8] : memref<2x4x256xf32, #tpu.memory_space<vmem>>, vector<2x1x256xf32>
    %17 = vector.shape_cast %16 : vector<2x1x256xf32> to vector<2x256xf32>
    %18 = arith.subf %17, %1 : vector<2x256xf32>
    %19 = arith.addf %13, %18 : vector<2x256xf32>
    %20 = arith.mulf %18, %18 : vector<2x256xf32>
    %21 = arith.addf %15, %20 : vector<2x256xf32>
    %cst_9 = arith.constant 2.500000e-01 : f32
    %22 = vector.broadcast %cst_9 : f32 to vector<2x256xf32>
    %23 = arith.mulf %19, %22 : vector<2x256xf32>
    %24 = arith.addf %1, %23 : vector<2x256xf32>
    %25 = arith.mulf %19, %19 : vector<2x256xf32>
    %cst_10 = arith.constant 2.500000e-01 : f32
    %26 = vector.broadcast %cst_10 : f32 to vector<2x256xf32>
    %27 = arith.mulf %25, %26 : vector<2x256xf32>
    %28 = arith.subf %21, %27 : vector<2x256xf32>
    %cst_11 = arith.constant 0.333333343 : f32
    %29 = vector.broadcast %cst_11 : f32 to vector<2x256xf32>
    %30 = arith.mulf %28, %29 : vector<2x256xf32>
    %cst_12 = arith.constant 0.000000e+00 : f32
    %31 = vector.broadcast %cst_12 : f32 to vector<2x256xf32>
    %32 = arith.maximumf %30, %31 : vector<2x256xf32>
    %33 = math.sqrt %32 : vector<2x256xf32>
    %c0_13 = arith.constant 0 : index
    %34 = memref.load %arg1[%c0_13] : memref<2xf32, #tpu.memory_space<smem>>
    %35 = vector.broadcast %34 : f32 to vector<2x256xf32>
    %36 = arith.mulf %35, %24 : vector<2x256xf32>
    %c1_14 = arith.constant 1 : index
    %37 = memref.load %arg1[%c1_14] : memref<2xf32, #tpu.memory_space<smem>>
    %38 = vector.broadcast %37 : f32 to vector<2x256xf32>
    %39 = arith.mulf %38, %33 : vector<2x256xf32>
    %40 = arith.addf %36, %39 : vector<2x256xf32>
    %41 = tpu.iota {dimensions = array<i32: 1>} : vector<2x256xi32>
    %c16_i32 = arith.constant 16 : i32
    %c0_i32 = arith.constant 0 : i32
    %42 = arith.cmpi eq, %c16_i32, %c0_i32 : i32
    %c1_i32 = arith.constant 1 : i32
    %43 = arith.select %42, %c1_i32, %c16_i32 : i32
    %44 = vector.broadcast %43 : i32 to vector<2x256xi32>
    %45 = arith.remsi %41, %44 : vector<2x256xi32>
    %c0_i32_15 = arith.constant 0 : i32
    %46 = vector.broadcast %c0_i32_15 : i32 to vector<2x256xi32>
    %47 = arith.cmpi ne, %45, %46 : vector<2x256xi32>
    %c0_i32_16 = arith.constant 0 : i32
    %48 = vector.broadcast %c0_i32_16 : i32 to vector<2x256xi32>
    %49 = arith.cmpi slt, %45, %48 : vector<2x256xi32>
    %c0_i32_17 = arith.constant 0 : i32
    %50 = arith.cmpi slt, %43, %c0_i32_17 : i32
    %51 = vector.broadcast %50 : i1 to vector<2x256xi1>
    %52 = vector.broadcast %51 : vector<2x256xi1> to vector<2x256xi1>
    %53 = arith.xori %49, %52 : vector<2x256xi1>
    %54 = arith.andi %53, %47 : vector<2x256xi1>
    %55 = vector.broadcast %43 : i32 to vector<2x256xi32>
    %56 = arith.addi %45, %55 : vector<2x256xi32>
    %57 = arith.select %54, %56, %45 : vector<2x256xi1>, vector<2x256xi32>
    %c1_i32_18 = arith.constant 1 : i32
    %58 = vector.broadcast %c1_i32_18 : i32 to vector<2x256xi32>
    %59 = arith.cmpi sge, %57, %58 : vector<2x256xi32>
    %c14_i32 = arith.constant 14 : i32
    %60 = vector.broadcast %c14_i32 : i32 to vector<2x256xi32>
    %61 = arith.cmpi sle, %57, %60 : vector<2x256xi32>
    %c16_i32_19 = arith.constant 16 : i32
    %62 = vector.broadcast %c16_i32_19 : i32 to vector<2x256xi32>
    %63 = arith.cmpi sge, %41, %62 : vector<2x256xi32>
    %c240_i32 = arith.constant 240 : i32
    %64 = vector.broadcast %c240_i32 : i32 to vector<2x256xi32>
    %65 = arith.cmpi slt, %41, %64 : vector<2x256xi32>
    %cst_20 = arith.constant 0.000000e+00 : f32
    %66 = vector.broadcast %cst_20 : f32 to vector<2x256xf32>
    %c1_i32_21 = arith.constant 1 : i32
    %67 = tpu.dynamic_rotate %40 by %c1_i32_21 dim 1 : vector<2x256xf32>, i32 -> vector<2x256xf32>
    %68 = arith.select %59, %67, %66 : vector<2x256xi1>, vector<2x256xf32>
    %c255_i32 = arith.constant 255 : i32
    %69 = tpu.dynamic_rotate %40 by %c255_i32 dim 1 : vector<2x256xf32>, i32 -> vector<2x256xf32>
    %70 = arith.select %61, %69, %66 : vector<2x256xi1>, vector<2x256xf32>
    %c0_22 = arith.constant 0 : index
    %71 = memref.load %arg2[%c0_22] : memref<9xf32, #tpu.memory_space<smem>>
    %72 = vector.broadcast %71 : f32 to vector<2x256xf32>
    %73 = arith.mulf %72, %68 : vector<2x256xf32>
    %c1_23 = arith.constant 1 : index
    %74 = memref.load %arg2[%c1_23] : memref<9xf32, #tpu.memory_space<smem>>
    %75 = vector.broadcast %74 : f32 to vector<2x256xf32>
    %76 = arith.mulf %75, %40 : vector<2x256xf32>
    %77 = arith.addf %73, %76 : vector<2x256xf32>
    %c2_24 = arith.constant 2 : index
    %78 = memref.load %arg2[%c2_24] : memref<9xf32, #tpu.memory_space<smem>>
    %79 = vector.broadcast %78 : f32 to vector<2x256xf32>
    %80 = arith.mulf %79, %70 : vector<2x256xf32>
    %81 = arith.addf %77, %80 : vector<2x256xf32>
    %c3_25 = arith.constant 3 : index
    %82 = memref.load %arg2[%c3_25] : memref<9xf32, #tpu.memory_space<smem>>
    %83 = vector.broadcast %82 : f32 to vector<2x256xf32>
    %84 = arith.mulf %83, %68 : vector<2x256xf32>
    %c4 = arith.constant 4 : index
    %85 = memref.load %arg2[%c4] : memref<9xf32, #tpu.memory_space<smem>>
    %86 = vector.broadcast %85 : f32 to vector<2x256xf32>
    %87 = arith.mulf %86, %40 : vector<2x256xf32>
    %88 = arith.addf %84, %87 : vector<2x256xf32>
    %c5 = arith.constant 5 : index
    %89 = memref.load %arg2[%c5] : memref<9xf32, #tpu.memory_space<smem>>
    %90 = vector.broadcast %89 : f32 to vector<2x256xf32>
    %91 = arith.mulf %90, %70 : vector<2x256xf32>
    %92 = arith.addf %88, %91 : vector<2x256xf32>
    %c6 = arith.constant 6 : index
    %93 = memref.load %arg2[%c6] : memref<9xf32, #tpu.memory_space<smem>>
    %94 = vector.broadcast %93 : f32 to vector<2x256xf32>
    %95 = arith.mulf %94, %68 : vector<2x256xf32>
    %c7 = arith.constant 7 : index
    %96 = memref.load %arg2[%c7] : memref<9xf32, #tpu.memory_space<smem>>
    %97 = vector.broadcast %96 : f32 to vector<2x256xf32>
    %98 = arith.mulf %97, %40 : vector<2x256xf32>
    %99 = arith.addf %95, %98 : vector<2x256xf32>
    %c8 = arith.constant 8 : index
    %100 = memref.load %arg2[%c8] : memref<9xf32, #tpu.memory_space<smem>>
    %101 = vector.broadcast %100 : f32 to vector<2x256xf32>
    %102 = arith.mulf %101, %70 : vector<2x256xf32>
    %103 = arith.addf %99, %102 : vector<2x256xf32>
    %c16_i32_26 = arith.constant 16 : i32
    %104 = tpu.dynamic_rotate %81 by %c16_i32_26 dim 1 : vector<2x256xf32>, i32 -> vector<2x256xf32>
    %105 = arith.select %63, %104, %66 : vector<2x256xi1>, vector<2x256xf32>
    %106 = arith.addf %105, %92 : vector<2x256xf32>
    %c240_i32_27 = arith.constant 240 : i32
    %107 = tpu.dynamic_rotate %103 by %c240_i32_27 dim 1 : vector<2x256xf32>, i32 -> vector<2x256xf32>
    %108 = arith.select %65, %107, %66 : vector<2x256xi1>, vector<2x256xf32>
    %109 = arith.addf %106, %108 : vector<2x256xf32>
    %c16_i32_28 = arith.constant 16 : i32
    %110 = tpu.dynamic_rotate %109 by %c16_i32_28 dim 1 : vector<2x256xf32>, i32 -> vector<2x256xf32>
    %111 = arith.select %63, %110, %66 : vector<2x256xi1>, vector<2x256xf32>
    %112 = arith.addf %111, %109 : vector<2x256xf32>
    %c240_i32_29 = arith.constant 240 : i32
    %113 = tpu.dynamic_rotate %109 by %c240_i32_29 dim 1 : vector<2x256xf32>, i32 -> vector<2x256xf32>
    %114 = arith.select %65, %113, %66 : vector<2x256xi1>, vector<2x256xf32>
    %115 = arith.addf %112, %114 : vector<2x256xf32>
    %c1_i32_30 = arith.constant 1 : i32
    %116 = tpu.dynamic_rotate %115 by %c1_i32_30 dim 1 : vector<2x256xf32>, i32 -> vector<2x256xf32>
    %117 = arith.select %59, %116, %66 : vector<2x256xi1>, vector<2x256xf32>
    %118 = arith.addf %117, %115 : vector<2x256xf32>
    %c255_i32_31 = arith.constant 255 : i32
    %119 = tpu.dynamic_rotate %115 by %c255_i32_31 dim 1 : vector<2x256xf32>, i32 -> vector<2x256xf32>
    %120 = arith.select %61, %119, %66 : vector<2x256xi1>, vector<2x256xf32>
    %121 = arith.addf %118, %120 : vector<2x256xf32>
    %cst_32 = arith.constant 0.111111112 : f32
    %122 = vector.broadcast %cst_32 : f32 to vector<2x256xf32>
    %123 = arith.mulf %121, %122 : vector<2x256xf32>
    %cst_33 = arith.constant 0.000000e+00 : f32
    %124 = vector.broadcast %cst_33 : f32 to vector<2x256xf32>
    %125 = arith.subf %124, %123 : vector<2x256xf32>
    %126 = math.exp %125 : vector<2x256xf32>
    %cst_34 = arith.constant 1.000000e+00 : f32
    %127 = vector.broadcast %cst_34 : f32 to vector<2x256xf32>
    %128 = arith.addf %127, %126 : vector<2x256xf32>
    %129 = tpu.reciprocal %128 : vector<2x256xf32> -> vector<2x256xf32>
    %c0_35 = arith.constant 0 : index
    %c0_36 = arith.constant 0 : index
    %130 = vector.load %arg4[%c0_35, %c0_36] : memref<2x256xf32, #tpu.memory_space<vmem>>, vector<2x256xf32>
    tpu.vector_store %arg4[%c0_35, %c0_36], %129 {strides = array<i32>} : memref<2x256xf32, #tpu.memory_space<vmem>>, vector<2x256xf32>,
    return
  }
  func.func @transform_0(%arg0: i32) -> i32 {
    %c0_i32 = arith.constant 0 : i32
    %c0_i32_0 = arith.constant 0 : i32
    return %c0_i32 : i32
  }
  func.func @transform_1(%arg0: i32) -> i32 {
    %c0_i32 = arith.constant 0 : i32
    %c0_i32_0 = arith.constant 0 : i32
    return %c0_i32 : i32
  }
  func.func @transform_2(%arg0: i32) -> (i32, i32, i32) {
    %c0_i32 = arith.constant 0 : i32
    %c0_i32_0 = arith.constant 0 : i32
    %c0_i32_1 = arith.constant 0 : i32
    return %arg0, %c0_i32, %c0_i32_0 : i32, i32, i32
  }
  func.func @transform_3(%arg0: i32) -> (i32, i32) {
    %c0_i32 = arith.constant 0 : i32
    %c0_i32_0 = arith.constant 0 : i32
    return %arg0, %c0_i32 : i32, i32
  }
}

</mosaic_0001>

<llo_original>
// kernel: tpu_custom_call.1
$region0: #{tpu_custom_call.1}
  #allocation0 [shape = 'u32[]', space=smem, size = 0x4, offset = 0x4, fixed_abs, tag = 'smem constant byte address 0x4 - core index']
  #allocation1 [shape = 'u32[144,128]{1,0:T(1,128)}', space=vmem, size = 0x12000, scoped, tag = 'internal scratch']
  %s0 = inlined_call_operand.hbm [shape: f32[2], index: 0, kind: input, shape index: {}]
  %s1 = inlined_call_operand.hbm [shape: f32[9], index: 1, kind: input, shape index: {}]
  %s2 = inlined_call_operand.hbm [shape: f32[2,4,256], index: 2, kind: input, shape index: {}]
  %s3 = inlined_call_operand.hbm [shape: f32[2,256], index: 3, kind: output, shape index: {}]
  %s4 = sld [smem:[#allocation0]]
  $region34: #{tpu_custom_call.1} parent=0
    _
  %s6 = ssub.s32 1, %s4
  %s7 = scalar_select 0, %s6, %s4
  $region1: #{tpu_custom_call.1} parent=0
    #allocation2 [shape = 'u8[512]{0}', space=smem, size = 0x200, scoped, tag = 'input window, operand 0, single buffered']
    #allocation3 [shape = 's32[1]{0}', space=sflag, size = 0x4, scoped, tag = 'scoped memory for tpu_custom_call.1']
    #allocation4 [shape = 's32[1]{0}', space=sflag, size = 0x4, scoped, tag = 'scoped memory for tpu_custom_call.1']
    #allocation5 [shape = 's32[1]{0}', space=sflag, size = 0x4, scoped, tag = 'scoped memory for tpu_custom_call.1']
    #allocation6 [shape = 'u8[512]{0}', space=smem, size = 0x200, scoped, tag = 'input window, operand 1, single buffered']
    #allocation7 [shape = 's32[1]{0}', space=sflag, size = 0x4, scoped, tag = 'scoped memory for tpu_custom_call.1']
    #allocation8 [shape = 'u8[8192]{0}', space=vmem, size = 0x2000, scoped, tag = 'input window, operand 2, single buffered']
    #allocation9 [shape = 'u8[2048]{0}', space=vmem, size = 0x800, scoped, tag = 'output window, operand 0, single buffered']
    %8 = vsyncpa [#allocation5], 0
    %9 = vsyncpa [#allocation7], 0
    %10 = vsyncpa [#allocation3], 0
    %11 = vsyncpa [#allocation4], 0
    // Predicated region
    $region2: #{tpu_custom_call.1} parent=1 // pred_check
      _
    $region3: #{tpu_custom_call.1} parent=1 // pred_check_branch
      %13 = sbr.rel (0) target = $region5
    $region4: #{tpu_custom_call.1} parent=1 // pred_region
      %s15 = ssub.s32 16, 16
      %16 = vsyncadd [#allocation5], %s15
      %19 = dma.hbm_to_smem %s0, 16, [#allocation2], [#allocation5]
    $region5: #{tpu_custom_call.1} parent=1 // pred_fallthru
      _
    // Predicated region
    $region6: #{tpu_custom_call.1} parent=1 // pred_check
      _
    $region7: #{tpu_custom_call.1} parent=1 // pred_check_branch
      %21 = sbr.rel (0) target = $region9
    $region8: #{tpu_custom_call.1} parent=1 // pred_region
      %s23 = ssub.s32 16, 16
      %24 = vsyncadd [#allocation7], %s23
      %27 = dma.hbm_to_smem %s1, 16, [#allocation6], [#allocation7]
    $region9: #{tpu_custom_call.1} parent=1 // pred_fallthru
      _
    // Predicated region
    $region10: #{tpu_custom_call.1} parent=1 // pred_check
      _
    $region11: #{tpu_custom_call.1} parent=1 // pred_check_branch
      %29 = sbr.rel (0) target = $region13
    $region12: #{tpu_custom_call.1} parent=1 // pred_region
      %s31 = ssub.s32 256, 256
      %32 = vsyncadd [#allocation3], %s31
      %s33 = sshll.u32 [#allocation8], 4
      %s34 = int_to_ptr.vmem [resolvable:$true] %s33
      %39 = dma.hbm_to_vmem [thread:$0]  %s2, 256, %s34, [#allocation3], 128, 128, 8
    $region13: #{tpu_custom_call.1} parent=1 // pred_fallthru
      _
    // Predicated region
    $region14: #{tpu_custom_call.1} parent=1 // pred_check
      _
    $region15: #{tpu_custom_call.1} parent=1 // pred_check_branch
      %41 = sbr.rel (0) target = $region17
    $region16: #{tpu_custom_call.1} parent=1 // pred_region
      %42 = dma.done [#allocation5], 16
    $region17: #{tpu_custom_call.1} parent=1 // pred_fallthru
      _
    // Predicated region
    $region18: #{tpu_custom_call.1} parent=1 // pred_check
      _
    $region19: #{tpu_custom_call.1} parent=1 // pred_check_branch
      %44 = sbr.rel (0) target = $region21
    $region20: #{tpu_custom_call.1} parent=1 // pred_region
      %45 = dma.done [#allocation7], 16
    $region21: #{tpu_custom_call.1} parent=1 // pred_fallthru
      _
    // Predicated region
    $region22: #{tpu_custom_call.1} parent=1 // pred_check
      _
    $region23: #{tpu_custom_call.1} parent=1 // pred_check_branch
      %47 = sbr.rel (0) target = $region25
    $region24: #{tpu_custom_call.1} parent=1 // pred_region
      %48 = dma.done [#allocation3], 256
    $region25: #{tpu_custom_call.1} parent=1 // pred_fallthru
      _
    %49 = sfence
    %v50 = vld [vmem:[#allocation8] ss:$4 sm:$0x3]
    %s51 = scalar_lea.vmem [#allocation8], 8
    %v52 = vld [vmem:[%s51] ss:$4 sm:$0x3]
    %s53 = scalar_lea.vmem [#allocation8], 1
    %v54 = vld [vmem:[%s53] ss:$4 sm:$0x3]
    %s55 = scalar_lea.vmem [#allocation8], 9
    %v56 = vld [vmem:[%s55] ss:$4 sm:$0x3]
    %v57 = vsub.f32 %v54, %v50
    %v58 = vsub.f32 %v56, %v52
    %v59 = vadd.f32 %v57, 0.0
    %v60 = vadd.f32 %v58, 0.0
    %v61 = vmul.f32 %v57, %v57
    %v62 = vmul.f32 %v58, %v58
    %v63 = vadd.f32 %v61, 0.0
    %v64 = vadd.f32 %v62, 0.0
    %s65 = scalar_lea.vmem [#allocation8], 2
    %v66 = vld [vmem:[%s65] ss:$4 sm:$0x3]
    %s67 = scalar_lea.vmem [#allocation8], 10
    %v68 = vld [vmem:[%s67] ss:$4 sm:$0x3]
    %v69 = vsub.f32 %v66, %v50
    %v70 = vsub.f32 %v68, %v52
    %v71 = vadd.f32 %v59, %v69
    %v72 = vadd.f32 %v60, %v70
    %v73 = vmul.f32 %v69, %v69
    %v74 = vmul.f32 %v70, %v70
    %v75 = vadd.f32 %v63, %v73
    %v76 = vadd.f32 %v64, %v74
    %s77 = scalar_lea.vmem [#allocation8], 3
    %v78 = vld [vmem:[%s77] ss:$4 sm:$0x3]
    %s79 = scalar_lea.vmem [#allocation8], 11
    %v80 = vld [vmem:[%s79] ss:$4 sm:$0x3]
    %v81 = vsub.f32 %v78, %v50
    %v82 = vsub.f32 %v80, %v52
    %v83 = vadd.f32 %v71, %v81
    %v84 = vadd.f32 %v72, %v82
    %v85 = vmul.f32 %v81, %v81
    %v86 = vmul.f32 %v82, %v82
    %v87 = vadd.f32 %v75, %v85
    %v88 = vadd.f32 %v76, %v86
    %v89 = vmul.f32 %v83, 0.25
    %v90 = vmul.f32 %v84, 0.25
    %v91 = vadd.f32 %v50, %v89
    %v92 = vadd.f32 %v52, %v90
    %v93 = vmul.f32 %v83, %v83
    %v94 = vmul.f32 %v84, %v84
    %v95 = vmul.f32 %v93, 0.25
    %v96 = vmul.f32 %v94, 0.25
    %v97 = vsub.f32 %v87, %v95
    %v98 = vsub.f32 %v88, %v96
    %v99 = vmul.f32 %v97, 0.33333334
    %v100 = vmul.f32 %v98, 0.33333334
    %v101 = vmax.f32 %v99, 0.0
    %v102 = vmax.f32 %v100, 0.0
    %v103 = vrsqrt.pop %v101
    %v104 = vmul.f32 %v101, %v103
    %vm105 = vcmp.eq.f32.partialorder %v101, inf
    %v106 = vsel %vm105, %v101, %v104
    %vm107 = vcmp.eq.f32.partialorder %v101, 0.0
    %v108 = vand.u32 %v101, 2147483648
    %v109 = vsel %vm107, %v108, %v106
    %v110 = vrsqrt.pop %v102
    %v111 = vmul.f32 %v102, %v110
    %vm112 = vcmp.eq.f32.partialorder %v102, inf
    %v113 = vsel %vm112, %v102, %v111
    %vm114 = vcmp.eq.f32.partialorder %v102, 0.0
    %v115 = vand.u32 %v102, 2147483648
    %v116 = vsel %vm114, %v115, %v113
    %s117 = sld [smem:[#allocation2]]
    %v118 = vstv %s117
    %v119 = vmul.f32 %v118, %v91
    %v120 = vmul.f32 %v118, %v92
    %s121 = sld [smem:[#allocation2 + $0x1]]
    %v122 = vstv %s121
    %v123 = vmul.f32 %v122, %v109
    %v124 = vmul.f32 %v122, %v116
    %v125 = vadd.f32 %v119, %v123
    %v126 = vadd.f32 %v120, %v124
    %v127 = vlaneseq
    %v128 = vand.u32 %v127, 127
    %v129 = vadd.s32 %v128, 128
    %vm130 = vcmp.lt.s32.totalorder %v128, 0
    %v131 = vsub.s32 0, %v128
    %v132 = vsel %vm130, %v131, %v128
    %v133 = vshrl.u32 %v132, 4
    %v134 = vand.u32 %v132, 15
    %v135 = vsub.s32 0, %v134
    %v136 = vsel %vm130, %v135, %v134
    %vm137 = vcmp.lt.s32.totalorder %v129, 0
    %v138 = vsub.s32 0, %v129
    %v139 = vsel %vm137, %v138, %v129
    %v140 = vshrl.u32 %v139, 4
    %v141 = vand.u32 %v139, 15
    %v142 = vsub.s32 0, %v141
    %v143 = vsel %vm137, %v142, %v141
    %vm144 = vcmp.ne.s32.totalorder %v136, 0
    %vm145 = vcmp.ne.s32.totalorder %v143, 0
    %vm146 = vcmp.lt.s32.totalorder %v136, 0
    %vm147 = vcmp.lt.s32.totalorder %v143, 0
    %vm148 = vmand %vm146, %vm144
    %vm149 = vmand %vm147, %vm145
    %v150 = vadd.s32 %v136, 16
    %v151 = vadd.s32 %v143, 16
    %v152 = vsel %vm148, %v150, %v136
    %v153 = vsel %vm149, %v151, %v143
    %vm154 = vcmp.ge.s32.totalorder %v152, 1
    %vm155 = vcmp.ge.s32.totalorder %v153, 1
    %vm156 = vcmp.le.s32.totalorder %v152, 14
    %vm157 = vcmp.le.s32.totalorder %v153, 14
    %vm158 = vcmp.ge.s32.totalorder %v128, 16
    %vm159 = vcmp.ge.s32.totalorder %v129, 16
    %vm160 = vcmp.lt.s32.totalorder %v128, 240
    %vm161 = vcmp.lt.s32.totalorder %v129, 240
    %v164 = vcombine.low %v125, %v126
    %v166 = vunpack.c.l.s4 1966171168
    %v167 = vunpack.c.0.s8 %v166
    %v168 = vlaneseq
    %v169 = vshrl.u32 %v168, 7
    %v170 = vsub.s32 %v167, %v169
    %v171 = vrot.slane %v164, %v170
    %v172 = vcombine.high %v171, %v171
    %v174 = vunpack.c.l.s4 1966171168
    %v175 = vunpack.c.0.s8 %v174
    %v176 = vlaneseq
    %v177 = vshrl.u32 %v176, 7
    %v178 = vsub.s32 %v175, %v177
    %v179 = vrot.slane %v171, %v178
    %v181 = vunpack.c.l.s4 1966171168
    %v182 = vunpack.c.0.s8 %v181
    %v183 = vlaneseq
    %v184 = vshrl.u32 %v183, 7
    %v185 = vsub.s32 %v182, %v184
    %v186 = vrot.slane %v172, %v185
    %189 = vrot.lane.b32.xlu0 %v179, 1
    %v190 = vpop.permute.xlu0 %189
    %191 = vrot.lane.b32.xlu0 %v186, 1
    %v192 = vpop.permute.xlu0 %191
    %vm193 = vcmp.lt.s32.totalorder %v128, 1
    %v194 = vsel %vm193, %v190, %v192
    %v195 = vsel %vm193, %v192, %v190
    %v196 = vsel %vm154, %v195, 0.0
    %v197 = vsel %vm155, %v194, 0.0
    %198 = vrot.lane.b32.xlu0 %v179, 127
    %v199 = vpop.permute.xlu0 %198
    %200 = vrot.lane.b32.xlu0 %v186, 127
    %v201 = vpop.permute.xlu0 %200
    %vm202 = vcmp.lt.s32.totalorder %v128, 127
    %v203 = vsel %vm202, %v199, %v201
    %v204 = vsel %vm202, %v201, %v199
    %v205 = vsel %vm156, %v203, 0.0
    %v206 = vsel %vm157, %v204, 0.0
    %s207 = sld [smem:[#allocation6]]
    %v208 = vstv %s207
    %v209 = vmul.f32 %v208, %v196
    %v210 = vmul.f32 %v208, %v197
    %s211 = sld [smem:[#allocation6 + $0x1]]
    %v212 = vstv %s211
    %v213 = vmul.f32 %v212, %v125
    %v214 = vmul.f32 %v212, %v126
    %v217 = vcombine.low %v213, %v214
    %v219 = vunpack.c.l.s4 1966171168
    %v220 = vunpack.c.0.s8 %v219
    %v221 = vlaneseq
    %v222 = vshrl.u32 %v221, 7
    %v223 = vsub.s32 %v220, %v222
    %v224 = vrot.slane %v217, %v223
    %v225 = vcombine.high %v224, %v224
    %v227 = vunpack.c.l.s4 1966171168
    %v228 = vunpack.c.0.s8 %v227
    %v229 = vlaneseq
    %v230 = vshrl.u32 %v229, 7
    %v231 = vsub.s32 %v228, %v230
    %v232 = vrot.slane %v224, %v231
    %v234 = vunpack.c.l.s4 1966171168
    %v235 = vunpack.c.0.s8 %v234
    %v236 = vlaneseq
    %v237 = vshrl.u32 %v236, 7
    %v238 = vsub.s32 %v235, %v237
    %v239 = vrot.slane %v225, %v238
    %v242 = vadd.f32 %v209, %v232
    %v243 = vadd.f32 %v210, %v239
    %s244 = sld [smem:[#allocation6 + $0x2]]
    %v245 = vstv %s244
    %v246 = vmul.f32 %v245, %v205
    %v247 = vmul.f32 %v245, %v206
    %v248 = vadd.f32 %v242, %v246
    %v249 = vadd.f32 %v243, %v247
    %s250 = sld [smem:[#allocation6 + $0x3]]
    %v251 = vstv %s250
    %v252 = vmul.f32 %v251, %v196
    %v253 = vmul.f32 %v251, %v197
    %s254 = sld [smem:[#allocation6 + $0x4]]
    %v255 = vstv %s254
    %v256 = vmul.f32 %v255, %v125
    %v257 = vmul.f32 %v255, %v126
    %v260 = vcombine.low %v256, %v257
    %v262 = vunpack.c.l.s4 1966171168
    %v263 = vunpack.c.0.s8 %v262
    %v264 = vlaneseq
    %v265 = vshrl.u32 %v264, 7
    %v266 = vsub.s32 %v263, %v265
    %v267 = vrot.slane %v260, %v266
    %v268 = vcombine.high %v267, %v267
    %v270 = vunpack.c.l.s4 1966171168
    %v271 = vunpack.c.0.s8 %v270
    %v272 = vlaneseq
    %v273 = vshrl.u32 %v272, 7
    %v274 = vsub.s32 %v271, %v273
    %v275 = vrot.slane %v267, %v274
    %v277 = vunpack.c.l.s4 1966171168
    %v278 = vunpack.c.0.s8 %v277
    %v279 = vlaneseq
    %v280 = vshrl.u32 %v279, 7
    %v281 = vsub.s32 %v278, %v280
    %v282 = vrot.slane %v268, %v281
    %v285 = vadd.f32 %v252, %v275
    %v286 = vadd.f32 %v253, %v282
    %s287 = sld [smem:[#allocation6 + $0x5]]
    %v288 = vstv %s287
    %v289 = vmul.f32 %v288, %v205
    %v290 = vmul.f32 %v288, %v206
    %v291 = vadd.f32 %v285, %v289
    %v292 = vadd.f32 %v286, %v290
    %s293 = sld [smem:[#allocation6 + $0x6]]
    %v294 = vstv %s293
    %v295 = vmul.f32 %v294, %v196
    %v296 = vmul.f32 %v294, %v197
    %s297 = sld [smem:[#allocation6 + $0x7]]
    %v298 = vstv %s297
    %v299 = vmul.f32 %v298, %v125
    %v300 = vmul.f32 %v298, %v126
    %v303 = vcombine.low %v299, %v300
    %v305 = vunpack.c.l.s4 1966171168
    %v306 = vunpack.c.0.s8 %v305
    %v307 = vlaneseq
    %v308 = vshrl.u32 %v307, 7
    %v309 = vsub.s32 %v306, %v308
    %v310 = vrot.slane %v303, %v309
    %v311 = vcombine.high %v310, %v310
    %v313 = vunpack.c.l.s4 1966171168
    %v314 = vunpack.c.0.s8 %v313
    %v315 = vlaneseq
    %v316 = vshrl.u32 %v315, 7
    %v317 = vsub.s32 %v314, %v316
    %v318 = vrot.slane %v310, %v317
    %v320 = vunpack.c.l.s4 1966171168
    %v321 = vunpack.c.0.s8 %v320
    %v322 = vlaneseq
    %v323 = vshrl.u32 %v322, 7
    %v324 = vsub.s32 %v321, %v323
    %v325 = vrot.slane %v311, %v324
    %v328 = vadd.f32 %v295, %v318
    %v329 = vadd.f32 %v296, %v325
    %s330 = sld [smem:[#allocation6 + $0x8]]
    %v331 = vstv %s330
    %v332 = vmul.f32 %v331, %v205
    %v333 = vmul.f32 %v331, %v206
    %v334 = vadd.f32 %v328, %v332
    %v335 = vadd.f32 %v329, %v333
    %336 = vrot.lane.b32.xlu0 %v248, 16
    %v337 = vpop.permute.xlu0 %336
    %338 = vrot.lane.b32.xlu0 %v249, 16
    %v339 = vpop.permute.xlu0 %338
    %vm340 = vcmp.lt.s32.totalorder %v128, 16
    %v341 = vsel %vm340, %v337, %v339
    %v342 = vsel %vm340, %v339, %v337
    %v343 = vsel %vm158, %v342, 0.0
    %v344 = vsel %vm159, %v341, 0.0
    %v345 = vadd.f32 %v343, %v291
    %v346 = vadd.f32 %v344, %v292
    %347 = vrot.lane.b32.xlu0 %v334, 112
    %v348 = vpop.permute.xlu0 %347
    %349 = vrot.lane.b32.xlu0 %v335, 112
    %v350 = vpop.permute.xlu0 %349
    %vm351 = vcmp.lt.s32.totalorder %v128, 112
    %v352 = vsel %vm351, %v348, %v350
    %v353 = vsel %vm351, %v350, %v348
    %v354 = vsel %vm160, %v352, 0.0
    %v355 = vsel %vm161, %v353, 0.0
    %v356 = vadd.f32 %v345, %v354
    %v357 = vadd.f32 %v346, %v355
    %358 = vrot.lane.b32.xlu0 %v356, 16
    %v359 = vpop.permute.xlu0 %358
    %360 = vrot.lane.b32.xlu0 %v357, 16
    %v361 = vpop.permute.xlu0 %360
    %v362 = vsel %vm340, %v359, %v361
    %v363 = vsel %vm340, %v361, %v359
    %v364 = vsel %vm158, %v363, 0.0
    %v365 = vsel %vm159, %v362, 0.0
    %v366 = vadd.f32 %v364, %v356
    %v367 = vadd.f32 %v365, %v357
    %368 = vrot.lane.b32.xlu0 %v356, 112
    %v369 = vpop.permute.xlu0 %368
    %370 = vrot.lane.b32.xlu0 %v357, 112
    %v371 = vpop.permute.xlu0 %370
    %v372 = vsel %vm351, %v369, %v371
    %v373 = vsel %vm351, %v371, %v369
    %v374 = vsel %vm160, %v372, 0.0
    %v375 = vsel %vm161, %v373, 0.0
    %v376 = vadd.f32 %v366, %v374
    %v377 = vadd.f32 %v367, %v375
    %378 = vrot.lane.b32.xlu0 %v376, 1
    %v379 = vpop.permute.xlu0 %378
    %380 = vrot.lane.b32.xlu0 %v377, 1
    %v381 = vpop.permute.xlu0 %380
    %v382 = vsel %vm193, %v379, %v381
    %v383 = vsel %vm193, %v381, %v379
    %v384 = vsel %vm154, %v383, 0.0
    %v385 = vsel %vm155, %v382, 0.0
    %v386 = vadd.f32 %v384, %v376
    %v387 = vadd.f32 %v385, %v377
    %388 = vrot.lane.b32.xlu0 %v376, 127
    %v389 = vpop.permute.xlu0 %388
    %390 = vrot.lane.b32.xlu0 %v377, 127
    %v391 = vpop.permute.xlu0 %390
    %v392 = vsel %vm202, %v389, %v391
    %v393 = vsel %vm202, %v391, %v389
    %v394 = vsel %vm156, %v392, 0.0
    %v395 = vsel %vm157, %v393, 0.0
    %v396 = vadd.f32 %v386, %v394
    %v397 = vadd.f32 %v387, %v395
    %v398 = vmul.f32 %v396, 0.11111111
    %v399 = vmul.f32 %v397, 0.11111111
    %v400 = vsub.f32 0.0, %v398
    %v401 = vsub.f32 0.0, %v399
    %v402 = vmul.f32 %v400, 1.442695
    %v403 = vpow.pop %v402
    %v404 = vmul.f32 %v401, 1.442695
    %v405 = vpow.pop %v404
    %v406 = vadd.f32 %v403, 1.0
    %v407 = vadd.f32 %v405, 1.0
    %v408 = vrcp.pop %v406
    %v409 = vrcp.pop %v407
    %v412 = vcombine.low %v408, %v409
    %v414 = vunpack.c.l.s4 1983009808
    %v415 = vunpack.c.0.s8 %v414
    %v416 = vlaneseq
    %v417 = vshrl.u32 %v416, 7
    %v418 = vsub.s32 %v415, %v417
    %v419 = vrot.slane %v412, %v418
    %421 = vst [vmem:[#allocation9] sm:$0xf] %v419
    // Predicated region
    $region26: #{tpu_custom_call.1} parent=1 // pred_check
      _
    $region27: #{tpu_custom_call.1} parent=1 // pred_check_branch
      %423 = sbr.rel (0) target = $region29
    $region28: #{tpu_custom_call.1} parent=1 // pred_region
      %s425 = ssub.s32 64, 64
      %426 = vsyncadd [#allocation4], %s425
      %s428 = sshll.u32 [#allocation9], 4
      %s429 = int_to_ptr.vmem [resolvable:$true] %s428
      %431 = dma.vmem_to_hbm [thread:$0]  %s429, 64, %s3, [#allocation4]
    $region29: #{tpu_custom_call.1} parent=1 // pred_fallthru
      _
    // Predicated region
    $region30: #{tpu_custom_call.1} parent=1 // pred_check
      _
    $region31: #{tpu_custom_call.1} parent=1 // pred_check_branch
      %433 = sbr.rel (0) target = $region33
    $region32: #{tpu_custom_call.1} parent=1 // pred_region
      %434 = dma.done [#allocation4], 64
    $region33: #{tpu_custom_call.1} parent=1 // pred_fallthru
      _
    %435 = vsyncpa [#allocation3], 1
    %436 = vsyncpa [#allocation4], 1
    %437 = vsyncpa [#allocation5], 1
    %438 = vsyncpa [#allocation7], 1

</llo_original>
